<compile_context>
chip_gen: v5e
topology: v5e:2x2
jax: 0.10.0
libtpu: 0.0.40
codegen_flags: <defaults>
</compile_context>

<pallas_src>
import jax
import jax.numpy as jnp
from jax.experimental import pallas as pl
from jax.experimental.pallas import tpu as pltpu

# ----------------------------- model config ---------------------------------
C_IN, C_OUT, KH, KW = 4, 8, 3, 3
K_TAPS = KH * KW * C_IN          # 36 im2col rows
N_CLASSES = 10
BN_EPS = 1e-5
MXU_DTYPE = jnp.bfloat16         # conv-dot MXU input dtype (f32 accumulate / stats)

LATER_LAMBDA = 0.8
PRIOR_LAMBDA = 1.2
max_omega_weight = 0.1
used_omega_weight = 0.9


def create_lambda_list(param_names):
    """Python port of MAS create_lambda_list (bookkeeping only, no compute)."""
    model_layer_length = len(param_names)
    prior_length = 0
    lambda_list = []
    for index, name in enumerate(param_names):
        if name == "bn72.bias":
            prior_length = index
            lambda_list = [PRIOR_LAMBDA] * (prior_length + 1)
    lambda_list.extend([LATER_LAMBDA] * (model_layer_length - prior_length - 1))
    return lambda_list


# ----------------------------- fused Pallas kernel ---------------------------
def _fused_kernel(patch_ref, wconv_ref, bn_ref, fc_ref, pool_ref, out_ref):
    """conv3x3 (one im2col dot) + batch-stat BN + ReLU + global-avg-pool + FC.

    Layout: channels on sublanes, pixel rows on lanes -> every big temporary is
    (C_OUT, B*H*W) = (8, 512), i.e. 4 f32 vregs (lane-dense, no spills).

    patch_ref: (K_TAPS, N)          bf16 im2col; row = (dh,dw,c_in), col = b*H*W+h*W+w
    wconv_ref: (C_OUT, K_TAPS)      bf16 conv taps (bias dropped: cancelled by BN mean)
    bn_ref   : (C_OUT, 2)           f32; col 0 = gamma, col 1 = beta
    fc_ref   : (C_OUT+1, N_CLASSES) f32; rows 0..C_OUT-1 = fc_w.T, last row = fc_b
    pool_ref : (B, N)               f32 avg-pool selector, pre-scaled by 1/(H*W)
    out_ref  : (B, N_CLASSES)       f32
    """
    # --- whole conv as a single MXU pass: (8,36) @ (36,512) -> (8,512) f32.
    acc = jnp.dot(wconv_ref[...], patch_ref[...],
                  preferred_element_type=jnp.float32)                   # (C_OUT, N)

    # --- BatchNorm2d (training-mode, biased batch stats) + ReLU, affine folded.
    # Stats via lane-axis reductions on the otherwise-idle XLU (MXU kept for dots).
    inv_n = 1.0 / acc.shape[1]
    mean = jnp.sum(acc, axis=1, keepdims=True) * inv_n                  # (C_OUT, 1)
    var = jnp.sum(acc * acc, axis=1, keepdims=True) * inv_n - mean * mean
    scale = bn_ref[:, 0:1] * jax.lax.rsqrt(var + BN_EPS)                # gamma/sqrt(v+e)
    shift = bn_ref[:, 1:2] - mean * scale                               # beta - mean*s
    feat = jnp.maximum(acc * scale + shift, 0.0)                        # (C_OUT, N)

    # --- Global average pool: contract the lane axis against the precomputed
    # selector (NT / trans-B dimension numbers, as in splash attention).
    pooled = jax.lax.dot_general(
        pool_ref[...], feat, (((1,), (1,)), ((), ())),
        preferred_element_type=jnp.float32)                             # (B, C_OUT)

    # --- Final linear layer.
    logits = jnp.dot(pooled, fc_ref[0:C_OUT, :], preferred_element_type=jnp.float32)
    out_ref[...] = logits + fc_ref[C_OUT:C_OUT + 1, :]


# ------------------------------- wrappers ------------------------------------
def pack_params(params, batch, height, width):
    """One-time parameter / constant packing (outside the per-call jitted path)."""
    # Conv taps as (C_OUT, KH*KW*C_IN), column order (dh, dw, c_in).
    wconv = jnp.transpose(params["conv_w"], (0, 2, 3, 1)).reshape(C_OUT, K_TAPS)
    # NOTE: conv bias deliberately not packed -- training-mode BN subtracts the batch
    # mean right after the conv, which cancels a constant per-channel bias exactly.
    bn = jnp.stack([params["bn_gamma"], params["bn_beta"]], axis=1)      # (C_OUT, 2)
    fc = jnp.concatenate(
        [params["fc_w"].T, params["fc_b"].reshape(1, N_CLASSES)], axis=0)  # (C_OUT+1, 10)
    hw = height * width
    pool = jnp.repeat(jnp.eye(batch, dtype=jnp.float32), hw, axis=1) / hw  # (B, B*H*W)
    return {
        "wconv": wconv.astype(MXU_DTYPE),
        "bn": bn.astype(jnp.float32),
        "fc": fc.astype(jnp.float32),
        "pool": pool,
    }


def shared_model_forward(x, packed):
    """SharedModel(model)(x) == model(x): im2col in one fused XLA pad/gather, then a
    single gridless pallas_call that keeps everything in VMEM/vregs."""
    B, C, H, W = x.shape
    assert C == C_IN
    n = B * H * W

    # Wrapper-side im2col straight into the transposed lane-dense (K_TAPS, B*H*W)
    # layout the kernel wants.  Under jit, XLA fuses the pad + 9 slices + concat +
    # transpose into one small gather-style fusion -> per-call path is ~1 XLA op
    # plus the pallas_call.
    xpad = jnp.pad(x.astype(MXU_DTYPE), ((0, 0), (0, 0), (1, 1), (1, 1)))
    taps = [xpad[:, :, dh:dh + H, dw:dw + W] for dh in range(KH) for dw in range(KW)]
    patch_t = jnp.transpose(jnp.stack(taps, axis=0), (0, 2, 1, 3, 4)).reshape(K_TAPS, n)

    # TODO(synk): if B*H*W ever scales up, add a lane-tile grid axis marked "parallel"
    # (uses both v7x TensorCores) with accumulated BN stats and a vmem_limit_bytes.
    return pl.pallas_call(
        _fused_kernel,
        out_shape=jax.ShapeDtypeStruct((B, N_CLASSES), jnp.float32),
        in_specs=[
            pl.BlockSpec((K_TAPS, n), lambda: (0, 0)),
            pl.BlockSpec((C_OUT, K_TAPS), lambda: (0, 0)),
            pl.BlockSpec((C_OUT, 2), lambda: (0, 0)),
            pl.BlockSpec((C_OUT + 1, N_CLASSES), lambda: (0, 0)),
            pl.BlockSpec((B, n), lambda: (0, 0)),
        ],
        out_specs=pl.BlockSpec((B, N_CLASSES), lambda: (0, 0)),
    )(patch_t, packed["wconv"], packed["bn"], packed["fc"], packed["pool"])


def reference_forward(x, params):
    """Pure-JAX (f32) reference of the same tmodel for a correctness check."""
    x = x.astype(jnp.float32)
    y = jax.lax.conv_general_dilated(
        x, params["conv_w"], window_strides=(1, 1), padding="SAME",
        dimension_numbers=("NCHW", "OIHW", "NCHW"),
    ) + params["conv_b"].reshape(1, C_OUT, 1, 1)
    mean = jnp.mean(y, axis=(0, 2, 3), keepdims=True)
    var = jnp.mean((y - mean) ** 2, axis=(0, 2, 3), keepdims=True)
    y = params["bn_gamma"].reshape(1, C_OUT, 1, 1) * (y - mean) * jax.lax.rsqrt(
        var + BN_EPS
    ) + params["bn_beta"].reshape(1, C_OUT, 1, 1)
    y = jnp.maximum(y, 0.0)
    pooled = jnp.mean(y, axis=(2, 3))                                    # (B, C_OUT)
    return pooled @ params["fc_w"].T + params["fc_b"]


def init_params(key):
    k1, k2, k3, k4 = jax.random.split(key, 4)
    return {
        "conv_w": 0.1 * jax.random.normal(k1, (C_OUT, C_IN, KH, KW), jnp.float32),
        "conv_b": 0.05 * jax.random.normal(k2, (C_OUT,), jnp.float32),
        "bn_gamma": jnp.ones((C_OUT,), jnp.float32),
        "bn_beta": jnp.zeros((C_OUT,), jnp.float32),
        "fc_w": 0.1 * jax.random.normal(k3, (N_CLASSES, C_OUT), jnp.float32),
        "fc_b": 0.05 * jax.random.normal(k4, (N_CLASSES,), jnp.float32),
    }


if __name__ == "__main__":
    key = jax.random.PRNGKey(0)
    pkey, xkey = jax.random.split(key)
    params = init_params(pkey)

    # SharedModel.__init__ bookkeeping (no effect on forward).
    param_names = ["conv1.weight", "conv1.bias", "bn72.weight", "bn72.bias",
                   "fc.weight", "fc.bias"]
    lambda_list = create_lambda_list(param_names)
    reg_params = {}  # MAS omega storage; unused in forward.

    B, H, W = 2, 16, 16
    x = jax.random.normal(xkey, (B, C_IN, H, W), jnp.float32)  # NCHW, like PyTorch

    packed = pack_params(params, B, H, W)   # one-time packing, outside the jitted path
    fwd = jax.jit(shared_model_forward)
    out = jax.block_until_ready(fwd(x, packed))

    ref = reference_forward(x, params)
    assert out.shape == (B, N_CLASSES)
    # bf16 MXU inputs for the conv dot (per v6e/v7x feedback) give ~1e-3-level
    # deviation from the pure-f32 reference; structural bugs would be >> 1e-2.
    assert jnp.allclose(out, ref, rtol=1e-2, atol=1e-2), "mismatch vs reference"

    print("KERNEL_OK")
</pallas_src>

<mosaic_0001>
module attributes {stable_mosaic.version = 11 : i64} {
  func.func @_fused_kernel(%arg0: memref<36x512xbf16, #tpu.memory_space<vmem>>, %arg1: memref<8x36xbf16, #tpu.memory_space<vmem>>, %arg2: memref<8x2xf32, #tpu.memory_space<vmem>>, %arg3: memref<9x10xf32, #tpu.memory_space<vmem>>, %arg4: memref<2x512xf32, #tpu.memory_space<vmem>>, %arg5: memref<2x10xf32, #tpu.memory_space<vmem>>) attributes {dimension_semantics = [], scalar_prefetch = 0 : i64, scratch_operands = 0 : i64, tpu.core_type = #tpu.core_type<tc>} {
    %c0 = arith.constant 0 : index
    %c0_0 = arith.constant 0 : index
    %0 = vector.load %arg1[%c0, %c0_0] : memref<8x36xbf16, #tpu.memory_space<vmem>>, vector<8x36xbf16>
    %c0_1 = arith.constant 0 : index
    %c0_2 = arith.constant 0 : index
    %1 = vector.load %arg0[%c0_1, %c0_2] : memref<36x512xbf16, #tpu.memory_space<vmem>>, vector<36x512xbf16>
    %cst = arith.constant dense<0.000000e+00> : vector<8x512xf32>
    %2 = tpu.matmul %0, %1, %cst {dimension_numbers = #tpu.dot_dimension_numbers<[1], [0], [0], [1], [0, 0, 1, 1], [], []>} : vector<8x36xbf16>, vector<36x512xbf16>, vector<8x512xf32> -> vector<8x512xf32>
    %cst_3 = arith.constant dense<0.000000e+00> : vector<8xf32>
    %3 = vector.multi_reduction <add>, %2, %cst_3 [1] : vector<8x512xf32> to vector<8xf32>
    %4 = vector.shape_cast %3 : vector<8xf32> to vector<8x1xf32>
    %cst_4 = arith.constant 0.001953125 : f32
    %5 = vector.broadcast %cst_4 : f32 to vector<8x1xf32>
    %6 = arith.mulf %4, %5 : vector<8x1xf32>
    %7 = arith.mulf %2, %2 : vector<8x512xf32>
    %cst_5 = arith.constant dense<0.000000e+00> : vector<8xf32>
    %8 = vector.multi_reduction <add>, %7, %cst_5 [1] : vector<8x512xf32> to vector<8xf32>
    %9 = vector.shape_cast %8 : vector<8xf32> to vector<8x1xf32>
    %cst_6 = arith.constant 0.001953125 : f32
    %10 = vector.broadcast %cst_6 : f32 to vector<8x1xf32>
    %11 = arith.mulf %9, %10 : vector<8x1xf32>
    %12 = arith.mulf %6, %6 : vector<8x1xf32>
    %13 = arith.subf %11, %12 : vector<8x1xf32>
    %c0_7 = arith.constant 0 : index
    %c0_8 = arith.constant 0 : index
    %14 = vector.load %arg2[%c0_7, %c0_8] : memref<8x2xf32, #tpu.memory_space<vmem>>, vector<8x1xf32>
    %cst_9 = arith.constant 9.99999974E-6 : f32
    %15 = vector.broadcast %cst_9 : f32 to vector<8x1xf32>
    %16 = arith.addf %13, %15 : vector<8x1xf32>
    %17 = math.rsqrt %16 : vector<8x1xf32>
    %18 = arith.mulf %14, %17 : vector<8x1xf32>
    %c0_10 = arith.constant 0 : index
    %c1 = arith.constant 1 : index
    %19 = vector.load %arg2[%c0_10, %c1] : memref<8x2xf32, #tpu.memory_space<vmem>>, vector<8x1xf32>
    %20 = arith.mulf %6, %18 : vector<8x1xf32>
    %21 = arith.subf %19, %20 : vector<8x1xf32>
    %22 = vector.broadcast %18 : vector<8x1xf32> to vector<8x512xf32>
    %23 = arith.mulf %2, %22 : vector<8x512xf32>
    %24 = vector.broadcast %21 : vector<8x1xf32> to vector<8x512xf32>
    %25 = arith.addf %23, %24 : vector<8x512xf32>
    %cst_11 = arith.constant 0.000000e+00 : f32
    %26 = vector.broadcast %cst_11 : f32 to vector<8x512xf32>
    %27 = arith.maximumf %25, %26 : vector<8x512xf32>
    %c0_12 = arith.constant 0 : index
    %c0_13 = arith.constant 0 : index
    %28 = vector.load %arg4[%c0_12, %c0_13] : memref<2x512xf32, #tpu.memory_space<vmem>>, vector<2x512xf32>
    %cst_14 = arith.constant dense<0.000000e+00> : vector<2x8xf32>
    %29 = tpu.matmul %28, %27, %cst_14 {dimension_numbers = #tpu.dot_dimension_numbers<[1], [1], [0], [0], [0, 0, 1, 0], [], []>} : vector<2x512xf32>, vector<8x512xf32>, vector<2x8xf32> -> vector<2x8xf32>
    %c0_15 = arith.constant 0 : index
    %c0_16 = arith.constant 0 : index
    %30 = vector.load %arg3[%c0_15, %c0_16] : memref<9x10xf32, #tpu.memory_space<vmem>>, vector<8x10xf32>
    %cst_17 = arith.constant dense<0.000000e+00> : vector<2x10xf32>
    %31 = tpu.matmul %29, %30, %cst_17 {dimension_numbers = #tpu.dot_dimension_numbers<[1], [0], [0], [1], [0, 0, 1, 1], [], []>} : vector<2x8xf32>, vector<8x10xf32>, vector<2x10xf32> -> vector<2x10xf32>
    %c8 = arith.constant 8 : index
    %c0_18 = arith.constant 0 : index
    %32 = vector.load %arg3[%c8, %c0_18] : memref<9x10xf32, #tpu.memory_space<vmem>>, vector<1x10xf32>
    %33 = vector.broadcast %32 : vector<1x10xf32> to vector<2x10xf32>
    %34 = arith.addf %31, %33 : vector<2x10xf32>
    %c0_19 = arith.constant 0 : index
    %c0_20 = arith.constant 0 : index
    %35 = vector.load %arg5[%c0_19, %c0_20] : memref<2x10xf32, #tpu.memory_space<vmem>>, vector<2x10xf32>
    tpu.vector_store %arg5[%c0_19, %c0_20], %34 {strides = array<i32>} : memref<2x10xf32, #tpu.memory_space<vmem>>, vector<2x10xf32>,
    return
  }
}

</mosaic_0001>

<llo_original>
// kernel: shared_model_forward.1
$region0: #{shared_model_forward.1}
  #allocation0 [shape = 'u32[]', space=smem, size = 0x4, offset = 0x4, fixed_abs, tag = 'smem constant byte address 0x4 - core index']
  #allocation1 [shape = 'u32[72,128]{1,0:T(1,128)}', space=vmem, size = 0x9000, scoped, tag = 'internal scratch']
  %s0 = inlined_call_operand.vmem [shape: bf16[36,512], index: 0, kind: input, shape index: {}]
  %s1 = inlined_call_operand.vmem [shape: bf16[8,36], index: 1, kind: input, shape index: {}]
  %s2 = inlined_call_operand.vmem [shape: f32[8,2], index: 2, kind: input, shape index: {}]
  %s3 = inlined_call_operand.vmem [shape: f32[9,10], index: 3, kind: input, shape index: {}]
  %s4 = inlined_call_operand.vmem [shape: f32[2,512], index: 4, kind: input, shape index: {}]
  %s5 = inlined_call_operand.hbm [shape: f32[2,10], index: 5, kind: output, shape index: {}]
  %s6 = sld [smem:[#allocation0]]
  $region30: #{shared_model_forward.1} parent=0
    _
  %s8 = ssub.s32 1, %s6
  %s9 = scalar_select 0, %s8, %s6
  $region1: #{shared_model_forward.1} parent=0
    #allocation2 [shape = 'u8[1024]{0}', space=vmem, size = 0x400, scoped, tag = 'output window, operand 0, single buffered']
    #allocation3 [shape = 's32[1]{0}', space=sflag, size = 0x4, scoped, tag = 'scoped memory for shared_model_forward.1']
    %10 = vsyncpa [#allocation3], 0
    // Predicated region
    $region2: #{shared_model_forward.1} parent=1 // pred_check
      _
    $region3: #{shared_model_forward.1} parent=1 // pred_check_branch
      %12 = sbr.rel (0) target = $region5
    $region4: #{shared_model_forward.1} parent=1 // pred_region
      _
    $region5: #{shared_model_forward.1} parent=1 // pred_fallthru
      _
    // Predicated region
    $region6: #{shared_model_forward.1} parent=1 // pred_check
      _
    $region7: #{shared_model_forward.1} parent=1 // pred_check_branch
      %14 = sbr.rel (0) target = $region9
    $region8: #{shared_model_forward.1} parent=1 // pred_region
      _
    $region9: #{shared_model_forward.1} parent=1 // pred_fallthru
      _
    // Predicated region
    $region10: #{shared_model_forward.1} parent=1 // pred_check
      _
    $region11: #{shared_model_forward.1} parent=1 // pred_check_branch
      %16 = sbr.rel (0) target = $region13
    $region12: #{shared_model_forward.1} parent=1 // pred_region
      _
    $region13: #{shared_model_forward.1} parent=1 // pred_fallthru
      _
    // Predicated region
    $region14: #{shared_model_forward.1} parent=1 // pred_check
      _
    $region15: #{shared_model_forward.1} parent=1 // pred_check_branch
      %18 = sbr.rel (0) target = $region17
    $region16: #{shared_model_forward.1} parent=1 // pred_region
      _
    $region17: #{shared_model_forward.1} parent=1 // pred_fallthru
      _
    // Predicated region
    $region18: #{shared_model_forward.1} parent=1 // pred_check
      _
    $region19: #{shared_model_forward.1} parent=1 // pred_check_branch
      %20 = sbr.rel (0) target = $region21
    $region20: #{shared_model_forward.1} parent=1 // pred_region
      _
    $region21: #{shared_model_forward.1} parent=1 // pred_fallthru
      _
    %v22 = vld [vmem:[%s1] sm:$0xf]
    %v23 = vld [vmem:[%s0] sm:$0xff]
    %v24 = vld [vmem:[%s0 + $0x8] sm:$0xff]
    %v25 = vld [vmem:[%s0 + $0x10] sm:$0xff]
    %v26 = vld [vmem:[%s0 + $0x18] sm:$0xff]
    %v27 = vld [vmem:[%s0 + $0x20] sm:$0xff]
    %v28 = vld [vmem:[%s0 + $0x28] sm:$0xff]
    %v29 = vld [vmem:[%s0 + $0x30] sm:$0xff]
    %v30 = vld [vmem:[%s0 + $0x38] sm:$0xff]
    %v31 = vld [vmem:[%s0 + $0x40] sm:$0x33]
    %v32 = vld [vmem:[%s0 + $0x48] sm:$0x33]
    %v43 = vunpack.c.l.b16 %v23
    %v44 = vunpack.c.h.b16 %v23
    %v45 = vunpack.c.l.b16 %v24
    %v46 = vunpack.c.h.b16 %v24
    %v47 = vunpack.c.l.b16 %v25
    %v48 = vunpack.c.h.b16 %v25
    %v49 = vunpack.c.l.b16 %v26
    %v50 = vunpack.c.h.b16 %v26
    %v51 = vunpack.c.l.b16 %v27
    %v52 = vunpack.c.h.b16 %v27
    %v53 = vunpack.c.l.b16 %v28
    %v54 = vunpack.c.h.b16 %v28
    %v55 = vunpack.c.l.b16 %v29
    %v56 = vunpack.c.h.b16 %v29
    %v57 = vunpack.c.l.b16 %v30
    %v58 = vunpack.c.h.b16 %v30
    %v59 = vunpack.c.l.b16 %v31
    %v60 = vunpack.c.h.b16 %v31
    %v61 = vunpack.c.l.b16 %v32
    %v62 = vunpack.c.h.b16 %v32
    %v63 = vpack.c.b16 %v47, %v43
    %v64 = vpack.c.b16 %v48, %v44
    %v65 = vpack.c.b16 %v49, %v45
    %v66 = vpack.c.b16 %v50, %v46
    %v67 = vpack.c.b16 %v55, %v51
    %v68 = vpack.c.b16 %v56, %v52
    %v69 = vpack.c.b16 %v57, %v53
    %v70 = vpack.c.b16 %v58, %v54
    %v71 = vpack.c.b16 %v59, %v59
    %v72 = vpack.c.b16 %v60, %v60
    %v73 = vpack.c.b16 %v61, %v61
    %v74 = vpack.c.b16 %v62, %v62
    %vm83 = vcmask 293888
    %v85 = vsel %vm83, %v22, 0
    %vm87 = vcmask 1041408
    %v89 = vsel %vm87, %v71, 0
    %v92 = vsel %vm87, %v72, 0
    %v95 = vsel %vm87, %v73, 0
    %v98 = vsel %vm87, %v74, 0
    %100 = vmatpush.bf16.msra.mxu0 0
    %101 = vmatpush.bf16.msra.mxu0 0
    %102 = vmatpush.bf16.msra.mxu0 0
    %103 = vmatpush.bf16.msra.mxu0 0
    %104 = vmatpush.bf16.msra.mxu0 0
    %105 = vmatpush.bf16.msra.mxu0 %v89
    %106 = vmatpush.bf16.msra.mxu0 %v67
    %107 = vmatpush.bf16.msra.mxu0 %v63
    %108 = vmatmul.bf16.gmra.mxu0 %v85
    %v109 = vpop.f32.mrf.mxu0
    %v110 = vadd.f32 0.0, %v109
    %v111 = vpop.f32.mrf.mxu0
    %112 = vdwg.mxu0
    %113 = vmatpush.bf16.msra.mxu0 0
    %114 = vmatpush.bf16.msra.mxu0 0
    %115 = vmatpush.bf16.msra.mxu0 0
    %116 = vmatpush.bf16.msra.mxu0 0
    %117 = vmatpush.bf16.msra.mxu0 0
    %118 = vmatpush.bf16.msra.mxu0 %v92
    %119 = vmatpush.bf16.msra.mxu0 %v68
    %120 = vmatpush.bf16.msra.mxu0 %v64
    %121 = vmatmul.bf16.gmra.mxu0 %v85
    %v122 = vpop.f32.mrf.mxu0
    %v123 = vadd.f32 0.0, %v122
    %v124 = vpop.f32.mrf.mxu0
    %125 = vdwg.mxu0
    %126 = vmatpush.bf16.msra.mxu0 0
    %127 = vmatpush.bf16.msra.mxu0 0
    %128 = vmatpush.bf16.msra.mxu0 0
    %129 = vmatpush.bf16.msra.mxu0 0
    %130 = vmatpush.bf16.msra.mxu0 0
    %131 = vmatpush.bf16.msra.mxu0 %v95
    %132 = vmatpush.bf16.msra.mxu0 %v69
    %133 = vmatpush.bf16.msra.mxu0 %v65
    %134 = vmatmul.bf16.gmra.mxu0 %v85
    %v135 = vpop.f32.mrf.mxu0
    %v136 = vadd.f32 0.0, %v135
    %v137 = vpop.f32.mrf.mxu0
    %138 = vdwg.mxu0
    %139 = vmatpush.bf16.msra.mxu0 0
    %140 = vmatpush.bf16.msra.mxu0 0
    %141 = vmatpush.bf16.msra.mxu0 0
    %142 = vmatpush.bf16.msra.mxu0 0
    %143 = vmatpush.bf16.msra.mxu0 0
    %144 = vmatpush.bf16.msra.mxu0 %v98
    %145 = vmatpush.bf16.msra.mxu0 %v70
    %146 = vmatpush.bf16.msra.mxu0 %v66
    %147 = vmatmul.bf16.gmra.mxu0 %v85
    %v148 = vpop.f32.mrf.mxu0
    %v149 = vadd.f32 0.0, %v148
    %v150 = vpop.f32.mrf.mxu0
    %151 = vdwg.mxu0
    %v152 = vadd.f32 %v110, %v123
    %v153 = vadd.f32 %v152, %v136
    %v154 = vadd.f32 %v153, %v149
    %155 = vadd.xlane.f32.xlu0 %v154
    %v156 = vpop.xlane.xlu0 %155
    %v157 = vmul.f32 %v156, 0.001953125
    %v158 = vmul.f32 %v110, %v110
    %v159 = vmul.f32 %v123, %v123
    %v160 = vmul.f32 %v136, %v136
    %v161 = vmul.f32 %v149, %v149
    %v162 = vadd.f32 %v158, %v159
    %v163 = vadd.f32 %v162, %v160
    %v164 = vadd.f32 %v163, %v161
    %165 = vadd.xlane.f32.xlu0 %v164
    %v166 = vpop.xlane.xlu0 %165
    %v167 = vmul.f32 %v166, 0.001953125
    %v168 = vmul.f32 %v157, %v157
    %v169 = vsub.f32 %v167, %v168
    %v170 = vld [vmem:[%s2] sm:$0xff]
    %v171 = vadd.f32 %v169, 1e-05
    %v172 = vrsqrt.pop %v171
    %v173 = vmul.f32 %v172, %v171
    %v174 = vmul.f32 %v173, %v172
    %v175 = vmul.f32 0.5, %v174
    %v176 = vsub.f32 1.5, %v175
    %v177 = vmul.f32 %v172, %v176
    %vm178 = vweird.f32 %v171
    %vm179 = vweird.f32 %v172
    %vm180 = vmor %vm178, %vm179
    %v181 = vsel %vm180, %v172, %v177
    %v182 = vmul.f32 %v170, %v181
    %v183 = vmul.f32 %v157, %v182
    %185 = vrot.lane.b32.xlu0 %v183, 1
    %v186 = vpop.permute.xlu0 %185
    %v188 = vsub.f32 %v170, %v186
    %190 = vset.pattern.permute.xlu0 0
    %191 = vperm.xlu0 %190, %v182
    %v192 = vpop.permute.xlu0 %191
    %v194 = vmul.f32 %v110, %v192
    %v195 = vmul.f32 %v123, %v192
    %v196 = vmul.f32 %v136, %v192
    %v197 = vmul.f32 %v149, %v192
    %199 = vset.pattern.permute.xlu0 1
    %200 = vperm.xlu0 %199, %v188
    %v201 = vpop.permute.xlu0 %200
    %v203 = vadd.f32 %v194, %v201
    %v204 = vadd.f32 %v195, %v201
    %v205 = vadd.f32 %v196, %v201
    %v206 = vadd.f32 %v197, %v201
    %v207 = vmax.f32 %v203, 0.0
    %v208 = vmax.f32 %v204, 0.0
    %v209 = vmax.f32 %v205, 0.0
    %v210 = vmax.f32 %v206, 0.0
    %v211 = vld [vmem:[%s4] sm:$0xff]
    %213 = vst [vmem:[#allocation1] ss:$4 sm:$0xff] %v211
    %v214 = vld.sshfl [vmem:[#allocation1] sm:$0xff pattern:$0x73625140]
    %v215 = vld.sshfl [vmem:[#allocation1 + $0x8] sm:$0xff pattern:$0x73625140]
    %v216 = vld.sshfl [vmem:[#allocation1 + $0x10] sm:$0xff pattern:$0x73625140]
    %v217 = vld.sshfl [vmem:[#allocation1 + $0x18] sm:$0xff pattern:$0x73625140]
    %222 = vmatpush.xpose.msra.mxu0 0.0
    %223 = vmatpush.xpose.msra.mxu0 0.0
    %224 = vmatpush.xpose.msra.mxu0 0.0
    %225 = vmatpush.xpose.msra.mxu0 0.0
    %226 = vmatpush.xpose.msra.mxu0 0.0
    %227 = vmatpush.xpose.msra.mxu0 0.0
    %228 = vmatpush.xpose.msra.mxu0 0.0
    %229 = vmatpush.xpose.msra.mxu0 0.0
    %230 = vmatpush.xpose.msra.mxu0 0.0
    %231 = vmatpush.xpose.msra.mxu0 0.0
    %232 = vmatpush.xpose.msra.mxu0 0.0
    %233 = vmatpush.xpose.msra.mxu0 0.0
    %234 = vmatpush.xpose.msra.mxu0 0.0
    %235 = vmatpush.xpose.msra.mxu0 0.0
    %236 = vmatpush.xpose.msra.mxu0 0.0
    %237 = vmatpush.xpose.msra.mxu0 %v207
    %238 = vmatmul.f32.gmra.mxu0 %v214
    %v239 = vpop.f32.mrf.mxu0
    %v240 = vadd.f32 0.0, %v239
    %241 = vdwg.mxu0
    %242 = vmatpush.xpose.msra.mxu0 0.0
    %243 = vmatpush.xpose.msra.mxu0 0.0
    %244 = vmatpush.xpose.msra.mxu0 0.0
    %245 = vmatpush.xpose.msra.mxu0 0.0
    %246 = vmatpush.xpose.msra.mxu0 0.0
    %247 = vmatpush.xpose.msra.mxu0 0.0
    %248 = vmatpush.xpose.msra.mxu0 0.0
    %249 = vmatpush.xpose.msra.mxu0 0.0
    %250 = vmatpush.xpose.msra.mxu0 0.0
    %251 = vmatpush.xpose.msra.mxu0 0.0
    %252 = vmatpush.xpose.msra.mxu0 0.0
    %253 = vmatpush.xpose.msra.mxu0 0.0
    %254 = vmatpush.xpose.msra.mxu0 0.0
    %255 = vmatpush.xpose.msra.mxu0 0.0
    %256 = vmatpush.xpose.msra.mxu0 0.0
    %257 = vmatpush.xpose.msra.mxu0 %v208
    %258 = vmatmul.f32.gmra.mxu0 %v215
    %v259 = vpop.f32.mrf.mxu0
    %v260 = vadd.f32 %v240, %v259
    %261 = vdwg.mxu0
    %262 = vmatpush.xpose.msra.mxu0 0.0
    %263 = vmatpush.xpose.msra.mxu0 0.0
    %264 = vmatpush.xpose.msra.mxu0 0.0
    %265 = vmatpush.xpose.msra.mxu0 0.0
    %266 = vmatpush.xpose.msra.mxu0 0.0
    %267 = vmatpush.xpose.msra.mxu0 0.0
    %268 = vmatpush.xpose.msra.mxu0 0.0
    %269 = vmatpush.xpose.msra.mxu0 0.0
    %270 = vmatpush.xpose.msra.mxu0 0.0
    %271 = vmatpush.xpose.msra.mxu0 0.0
    %272 = vmatpush.xpose.msra.mxu0 0.0
    %273 = vmatpush.xpose.msra.mxu0 0.0
    %274 = vmatpush.xpose.msra.mxu0 0.0
    %275 = vmatpush.xpose.msra.mxu0 0.0
    %276 = vmatpush.xpose.msra.mxu0 0.0
    %277 = vmatpush.xpose.msra.mxu0 %v209
    %278 = vmatmul.f32.gmra.mxu0 %v216
    %v279 = vpop.f32.mrf.mxu0
    %v280 = vadd.f32 %v260, %v279
    %281 = vdwg.mxu0
    %282 = vmatpush.xpose.msra.mxu0 0.0
    %283 = vmatpush.xpose.msra.mxu0 0.0
    %284 = vmatpush.xpose.msra.mxu0 0.0
    %285 = vmatpush.xpose.msra.mxu0 0.0
    %286 = vmatpush.xpose.msra.mxu0 0.0
    %287 = vmatpush.xpose.msra.mxu0 0.0
    %288 = vmatpush.xpose.msra.mxu0 0.0
    %289 = vmatpush.xpose.msra.mxu0 0.0
    %290 = vmatpush.xpose.msra.mxu0 0.0
    %291 = vmatpush.xpose.msra.mxu0 0.0
    %292 = vmatpush.xpose.msra.mxu0 0.0
    %293 = vmatpush.xpose.msra.mxu0 0.0
    %294 = vmatpush.xpose.msra.mxu0 0.0
    %295 = vmatpush.xpose.msra.mxu0 0.0
    %296 = vmatpush.xpose.msra.mxu0 0.0
    %297 = vmatpush.xpose.msra.mxu0 %v210
    %298 = vmatmul.f32.gmra.mxu0 %v217
    %v299 = vpop.f32.mrf.mxu0
    %v300 = vadd.f32 %v280, %v299
    %301 = vdwg.mxu0
    %v302 = vld [vmem:[%s3] sm:$0xff]
    %v303 = vld [vmem:[%s3 + $0x8] sm:$0x1]
    %v304 = vperm.slane %v303, 0
    %vm305 = vcmask 64512
    %v307 = vsel %vm305, %v300, 0
    %309 = vmatpush.msra.mxu0 0.0
    %310 = vmatpush.msra.mxu0 0.0
    %311 = vmatpush.msra.mxu0 0.0
    %312 = vmatpush.msra.mxu0 0.0
    %313 = vmatpush.msra.mxu0 0.0
    %314 = vmatpush.msra.mxu0 0.0
    %315 = vmatpush.msra.mxu0 0.0
    %316 = vmatpush.msra.mxu0 0.0
    %317 = vmatpush.msra.mxu0 0.0
    %318 = vmatpush.msra.mxu0 0.0
    %319 = vmatpush.msra.mxu0 0.0
    %320 = vmatpush.msra.mxu0 0.0
    %321 = vmatpush.msra.mxu0 0.0
    %322 = vmatpush.msra.mxu0 0.0
    %323 = vmatpush.msra.mxu0 0.0
    %324 = vmatpush.msra.mxu0 %v302
    %325 = vmatmul.f32.gmra.mxu0 %v307
    %v326 = vpop.f32.mrf.mxu0
    %v327 = vadd.f32 %v304, %v326
    %328 = vdwg.mxu0
    %vm329 = vcmask 74752
    %330 = vst.msk [vmem:[#allocation2] sm:$0x3] %vm329, %v327
    // Predicated region
    $region22: #{shared_model_forward.1} parent=1 // pred_check
      _
    $region23: #{shared_model_forward.1} parent=1 // pred_check_branch
      %332 = sbr.rel (0) target = $region25
    $region24: #{shared_model_forward.1} parent=1 // pred_region
      %334 = vsyncadd [#allocation3], 0
      %s336 = sshll.u32 [#allocation2], 4
      %s337 = int_to_ptr.vmem [resolvable:$true] %s336
      %s338 = sshll.u32 %s5, 4
      %s339 = int_to_ptr.hbm [resolvable:$true] %s338
      %341 = dma.vmem_to_hbm [thread:$0]  %s337, 32, %s339, [#allocation3]
    $region25: #{shared_model_forward.1} parent=1 // pred_fallthru
      _
    // Predicated region
    $region26: #{shared_model_forward.1} parent=1 // pred_check
      _
    $region27: #{shared_model_forward.1} parent=1 // pred_check_branch
      %343 = sbr.rel (0) target = $region29
    $region28: #{shared_model_forward.1} parent=1 // pred_region
      %345 = dma.done [#allocation3], 32
    $region29: #{shared_model_forward.1} parent=1 // pred_fallthru
      _
    %346 = vsyncpa [#allocation3], 1

</llo_original>
